<compile_context>
chip_gen: v5e
topology: v5e:2x2
jax: 0.10.0
libtpu: 0.0.40
codegen_flags: <defaults>
</compile_context>

<pallas_src>
import jax
import jax.numpy as jnp
from jax.experimental import pallas as pl
from jax.experimental.pallas import tpu as pltpu


def _round_up(x, m):
    return ((x + m - 1) // m) * m


def _pad2d(a, rows, cols):
    pr, pc = rows - a.shape[0], cols - a.shape[1]
    if pr or pc:
        a = jnp.pad(a, ((0, pr), (0, pc)))
    return a


def _sublane_multiple(dtype):
    # min sublane tiling per element width: f32 -> 8, bf16 -> 16, int8/fp8 -> 32
    return {4: 8, 2: 16, 1: 32}[jnp.dtype(dtype).itemsize]


def _tpu_defaults():
    """(vmem_capacity_bytes, feature_alignment) with conservative fallbacks."""
    vmem_cap = 64 * 1024 * 1024          # v7x-safe fallback (64 MiB / TC)
    align = 128
    try:
        vmem_cap = int(pltpu.get_tpu_info().vmem_capacity_bytes)
    except Exception:
        pass
    try:
        kind = jax.devices()[0].device_kind.lower()
        # v6e / v7x MXUs are 2x256x256 -> prefer 256-aligned feature dims.
        if not any(v in kind for v in ("v2", "v3", "v4", "v5")):
            align = 256
    except Exception:
        pass
    return vmem_cap, align


def ffn_kernel_accum_out(x_ref, w1_ref, b1_ref, w2_ref, b2_ref, o_ref):
    """f32 output: the output block index is (i, 0), so it stays VMEM-resident
    across the d_ff (k) axis -- accumulate straight into it (no scratch copy)."""
    kff = pl.program_id(1)

    @pl.when(kff == 0)
    def _init():
        o_ref[...] = jnp.broadcast_to(b2_ref[...], o_ref.shape)

    h = jnp.dot(x_ref[...], w1_ref[...], preferred_element_type=jnp.float32)
    h = jnp.maximum(h + b1_ref[...], 0.0)   # bias + ReLU in f32
    # TODO(synk): dropout omitted (inference / identity); a training-mode mask
    # could be drawn here with pltpu.prng_random_bits.
    o_ref[...] += jnp.dot(h.astype(w2_ref.dtype), w2_ref[...],
                          preferred_element_type=jnp.float32)


def ffn_kernel_scratch(x_ref, w1_ref, b1_ref, w2_ref, b2_ref, o_ref, acc_ref):
    """non-f32 output: accumulate in an f32 scratch, cast on the last k step."""
    kff = pl.program_id(1)

    @pl.when(kff == 0)
    def _init():
        acc_ref[...] = jnp.broadcast_to(b2_ref[...], acc_ref.shape)

    h = jnp.dot(x_ref[...], w1_ref[...], preferred_element_type=jnp.float32)
    h = jnp.maximum(h + b1_ref[...], 0.0)
    acc_ref[...] += jnp.dot(h.astype(w2_ref.dtype), w2_ref[...],
                            preferred_element_type=jnp.float32)

    @pl.when(kff == pl.num_programs(1) - 1)
    def _finalize():
        o_ref[...] = acc_ref[...].astype(o_ref.dtype)


def prepare_ffn_params(w1, b1, w2, b2, *, compute_dtype=jnp.bfloat16,
                       d_ff_tile=None, feature_align=None):
    """Pad + cast the weights ONCE (hoisted out of the per-call path).

    w1: (d_model, d_ff), b1: (d_ff,), w2: (d_ff, d_model), b2: (d_model,).
    Returns (params, meta) consumed by feed_forward.
    """
    d_model, d_ff = w1.shape
    vmem_cap, align = _tpu_defaults()
    if feature_align is not None:
        align = feature_align
    if d_ff_tile is None:
        # big VMEM (v5e/v6e, 128 MiB) -> larger reduction chunk; v7x (64 MiB) -> 512
        d_ff_tile = 1024 if vmem_cap >= (100 << 20) else 512

    dm_pad = _round_up(d_model, align)
    tff = _round_up(min(d_ff_tile, _round_up(d_ff, align)), align)
    dff_pad = _round_up(d_ff, tff)

    wdt = jnp.dtype(compute_dtype) if compute_dtype is not None else w1.dtype
    w1p = _pad2d(w1, dm_pad, dff_pad).astype(wdt)
    w2p = _pad2d(w2, dff_pad, dm_pad).astype(wdt)
    b1p = _pad2d(b1.reshape(1, d_ff), 1, dff_pad).astype(jnp.float32)
    b2p = _pad2d(b2.reshape(1, d_model), 1, dm_pad).astype(jnp.float32)

    meta = dict(d_model=d_model, d_ff=d_ff, dm_pad=dm_pad, dff_pad=dff_pad,
                tff=tff, compute_dtype=wdt, vmem_cap=vmem_cap)
    return (w1p, b1p, w2p, b2p), meta


def feed_forward(x, params, meta, *, tile_rows=None):
    """x: (B, S, d_model); params/meta from prepare_ffn_params.
    Returns (B, S, d_model) in x.dtype."""
    w1p, b1p, w2p, b2p = params
    B, S, d_model = x.shape
    assert d_model == meta["d_model"]
    out_dtype = x.dtype
    N = B * S
    dm_pad, dff_pad = meta["dm_pad"], meta["dff_pad"]
    tff = meta["tff"]
    compute_dtype = meta["compute_dtype"]
    vmem_cap = meta["vmem_cap"]

    sub = _sublane_multiple(compute_dtype)
    if tile_rows is None:
        # Bigger row tile => full W1+W2 are streamed fewer times.
        tile_rows = 1024 if vmem_cap >= (100 << 20) else 512
    tm = _round_up(min(tile_rows, _round_up(N, sub)), sub)

    xb = jnp.dtype(compute_dtype).itemsize
    ob = jnp.dtype(out_dtype).itemsize
    direct = jnp.dtype(out_dtype) == jnp.dtype(jnp.float32)

    def footprint(tm_, tff_):
        return (2 * tm_ * dm_pad * xb            # x tile (double buffered)
                + 2 * dm_pad * tff_ * xb         # W1 chunk
                + 2 * tff_ * dm_pad * xb         # W2 chunk
                + 2 * tff_ * 4 + 2 * dm_pad * 4  # biases
                + 2 * tm_ * dm_pad * ob          # out tile
                + (0 if direct else tm_ * dm_pad * 4))   # f32 scratch

    budget = int(0.9 * vmem_cap)
    while footprint(tm, tff) > budget and tm > 256:
        tm = max(256, _round_up(tm // 2, sub))
    while (footprint(tm, tff) > budget and tff > 128
           and tff % 2 == 0 and dff_pad % (tff // 2) == 0):
        tff //= 2

    n_pad = _round_up(N, tm)
    x2 = _pad2d(x.reshape(N, d_model), n_pad, dm_pad).astype(compute_dtype)

    grid = (n_pad // tm, dff_pad // tff)          # d_ff reduction axis last

    flops = 4 * n_pad * dm_pad * dff_pad          # two matmuls, 2 flops/MAC
    bytes_accessed = int(x2.size * xb + n_pad * dm_pad * ob
                         + grid[0] * (w1p.size + w2p.size) * xb
                         + (b1p.size + b2p.size) * 4)
    cost = pl.CostEstimate(flops=flops, transcendentals=0,
                           bytes_accessed=bytes_accessed)

    kernel = ffn_kernel_accum_out if direct else ffn_kernel_scratch
    scratch = () if direct else (pltpu.VMEM((tm, dm_pad), jnp.float32),)

    vmem_limit = min(budget, max(footprint(tm, tff) + (4 << 20), 32 << 20))

    out = pl.pallas_call(
        kernel,
        out_shape=jax.ShapeDtypeStruct((n_pad, dm_pad), out_dtype),
        grid_spec=pltpu.PrefetchScalarGridSpec(
            num_scalar_prefetch=0,
            grid=grid,
            in_specs=[
                pl.BlockSpec((tm, dm_pad), lambda i, k: (i, 0)),    # x tile
                pl.BlockSpec((dm_pad, tff), lambda i, k: (0, k)),   # W1 chunk
                pl.BlockSpec((1, tff), lambda i, k: (0, k)),        # b1 chunk
                pl.BlockSpec((tff, dm_pad), lambda i, k: (k, 0)),   # W2 chunk
                pl.BlockSpec((1, dm_pad), lambda i, k: (0, 0)),     # b2
            ],
            out_specs=pl.BlockSpec((tm, dm_pad), lambda i, k: (i, 0)),
            scratch_shapes=scratch,
        ),
        compiler_params=pltpu.CompilerParams(
            dimension_semantics=("parallel", "arbitrary"),
            vmem_limit_bytes=vmem_limit),
        cost_estimate=cost,
    )(x2, w1p, b1p, w2p, b2p)

    return out[:N, :d_model].reshape(B, S, d_model)


def init_params(key, d_model, d_ff):
    """Matches nn.Linear's U(-1/sqrt(fan_in), 1/sqrt(fan_in)) init."""
    k1, k2, k3, k4 = jax.random.split(key, 4)
    bound1 = 1.0 / jnp.sqrt(d_model)
    bound2 = 1.0 / jnp.sqrt(d_ff)
    # stored transposed relative to PyTorch (out,in) -> (in,out)
    w1 = jax.random.uniform(k1, (d_model, d_ff), jnp.float32, -bound1, bound1)
    b1 = jax.random.uniform(k2, (d_ff,), jnp.float32, -bound1, bound1)
    w2 = jax.random.uniform(k3, (d_ff, d_model), jnp.float32, -bound2, bound2)
    b2 = jax.random.uniform(k4, (d_model,), jnp.float32, -bound2, bound2)
    return w1, b1, w2, b2


if __name__ == "__main__":
    key = jax.random.PRNGKey(0)
    B, S, d_model, d_ff = 2, 8, 32, 64
    kx, kp = jax.random.split(key)
    x = jax.random.normal(kx, (B, S, d_model), jnp.float32)
    w1, b1, w2, b2 = init_params(kp, d_model, d_ff)

    # Weights padded + cast to bf16 ONCE here (hoisted out of the call path).
    params, meta = prepare_ffn_params(w1, b1, w2, b2, compute_dtype=jnp.bfloat16)

    y = feed_forward(x, params, meta)
    jax.block_until_ready(y)

    # pure-JAX reference with matching bf16-compute / f32-accumulate numerics
    xr = x.reshape(-1, d_model).astype(jnp.bfloat16)
    h = jnp.maximum(jnp.dot(xr, w1.astype(jnp.bfloat16),
                            preferred_element_type=jnp.float32) + b1[None, :], 0.0)
    ref = (jnp.dot(h.astype(jnp.bfloat16), w2.astype(jnp.bfloat16),
                   preferred_element_type=jnp.float32) + b2[None, :]
           ).reshape(B, S, d_model)
    assert jnp.allclose(y, ref, atol=2e-3, rtol=2e-3), "mismatch vs reference"
    print("KERNEL_OK")
</pallas_src>

<mosaic_0001>
module attributes {stable_mosaic.version = 11 : i64} {
  func.func @ffn_kernel_accum_out(%arg0: i32, %arg1: i32, %arg2: memref<16x256xbf16, #tpu.memory_space<vmem>>, %arg3: memref<256x256xbf16, #tpu.memory_space<vmem>>, %arg4: memref<1x256xf32, #tpu.memory_space<vmem>>, %arg5: memref<256x256xbf16, #tpu.memory_space<vmem>>, %arg6: memref<1x256xf32, #tpu.memory_space<vmem>>, %arg7: memref<16x256xf32, #tpu.memory_space<vmem>>) attributes {dimension_semantics = [#tpu.dimension_semantics<parallel>, #tpu.dimension_semantics<arbitrary>], iteration_bounds = array<i64: 1, 1>, scalar_prefetch = 0 : i64, scratch_operands = 0 : i64, tpu.core_type = #tpu.core_type<tc>, window_params = [{transform_indices = @transform_0, window_bounds = array<i64: 16, 256>}, {transform_indices = @transform_1, window_bounds = array<i64: 256, 256>}, {transform_indices = @transform_2, window_bounds = array<i64: 1, 256>}, {transform_indices = @transform_3, window_bounds = array<i64: 256, 256>}, {pipeline_mode = #tpu.pipeline_mode<synchronous>, transform_indices = @transform_4, window_bounds = array<i64: 1, 256>}, {transform_indices = @transform_5, window_bounds = array<i64: 16, 256>}]} {
    %c0_i32 = arith.constant 0 : i32
    %0 = arith.cmpi eq, %arg1, %c0_i32 : i32
    %1 = arith.extui %0 : i1 to i32
    %c0_i32_0 = arith.constant 0 : i32
    %2 = arith.cmpi ne, %1, %c0_i32_0 : i32
    scf.if %2 {
      %c0_14 = arith.constant 0 : index
      %c0_15 = arith.constant 0 : index
      %17 = vector.load %arg6[%c0_14, %c0_15] : memref<1x256xf32, #tpu.memory_space<vmem>>, vector<1x256xf32>
      %18 = vector.shape_cast %17 : vector<1x256xf32> to vector<1x256xf32>
      %19 = vector.broadcast %18 : vector<1x256xf32> to vector<16x256xf32>
      %c0_16 = arith.constant 0 : index
      %c0_17 = arith.constant 0 : index
      %20 = vector.load %arg7[%c0_16, %c0_17] : memref<16x256xf32, #tpu.memory_space<vmem>>, vector<16x256xf32>
      tpu.vector_store %arg7[%c0_16, %c0_17], %19 {strides = array<i32>} : memref<16x256xf32, #tpu.memory_space<vmem>>, vector<16x256xf32>,
    } else {
    }
    %c0 = arith.constant 0 : index
    %c0_1 = arith.constant 0 : index
    %3 = vector.load %arg2[%c0, %c0_1] : memref<16x256xbf16, #tpu.memory_space<vmem>>, vector<16x256xbf16>
    %c0_2 = arith.constant 0 : index
    %c0_3 = arith.constant 0 : index
    %4 = vector.load %arg3[%c0_2, %c0_3] : memref<256x256xbf16, #tpu.memory_space<vmem>>, vector<256x256xbf16>
    %cst = arith.constant dense<0.000000e+00> : vector<16x256xf32>
    %5 = tpu.matmul %3, %4, %cst {dimension_numbers = #tpu.dot_dimension_numbers<[1], [0], [0], [1], [0, 0, 1, 1], [], []>} : vector<16x256xbf16>, vector<256x256xbf16>, vector<16x256xf32> -> vector<16x256xf32>
    %c0_4 = arith.constant 0 : index
    %c0_5 = arith.constant 0 : index
    %6 = vector.load %arg4[%c0_4, %c0_5] : memref<1x256xf32, #tpu.memory_space<vmem>>, vector<1x256xf32>
    %7 = vector.broadcast %6 : vector<1x256xf32> to vector<16x256xf32>
    %8 = arith.addf %5, %7 : vector<16x256xf32>
    %cst_6 = arith.constant 0.000000e+00 : f32
    %9 = vector.broadcast %cst_6 : f32 to vector<16x256xf32>
    %10 = arith.maximumf %8, %9 : vector<16x256xf32>
    %c0_7 = arith.constant 0 : index
    %c0_8 = arith.constant 0 : index
    %11 = vector.load %arg7[%c0_7, %c0_8] : memref<16x256xf32, #tpu.memory_space<vmem>>, vector<16x256xf32>
    %12 = arith.truncf %10 : vector<16x256xf32> to vector<16x256xbf16>
    %c0_9 = arith.constant 0 : index
    %c0_10 = arith.constant 0 : index
    %13 = vector.load %arg5[%c0_9, %c0_10] : memref<256x256xbf16, #tpu.memory_space<vmem>>, vector<256x256xbf16>
    %cst_11 = arith.constant dense<0.000000e+00> : vector<16x256xf32>
    %14 = tpu.matmul %12, %13, %cst_11 {dimension_numbers = #tpu.dot_dimension_numbers<[1], [0], [0], [1], [0, 0, 1, 1], [], []>} : vector<16x256xbf16>, vector<256x256xbf16>, vector<16x256xf32> -> vector<16x256xf32>
    %15 = arith.addf %11, %14 : vector<16x256xf32>
    %c0_12 = arith.constant 0 : index
    %c0_13 = arith.constant 0 : index
    %16 = vector.load %arg7[%c0_12, %c0_13] : memref<16x256xf32, #tpu.memory_space<vmem>>, vector<16x256xf32>
    tpu.vector_store %arg7[%c0_12, %c0_13], %15 {strides = array<i32>} : memref<16x256xf32, #tpu.memory_space<vmem>>, vector<16x256xf32>,
    return
  }
  func.func @transform_0(%arg0: i32, %arg1: i32) -> (i32, i32) {
    %c0_i32 = arith.constant 0 : i32
    %c0_i32_0 = arith.constant 0 : i32
    return %arg0, %c0_i32 : i32, i32
  }
  func.func @transform_1(%arg0: i32, %arg1: i32) -> (i32, i32) {
    %c0_i32 = arith.constant 0 : i32
    %c0_i32_0 = arith.constant 0 : i32
    return %c0_i32, %arg1 : i32, i32
  }
  func.func @transform_2(%arg0: i32, %arg1: i32) -> (i32, i32) {
    %c0_i32 = arith.constant 0 : i32
    %c0_i32_0 = arith.constant 0 : i32
    return %c0_i32, %arg1 : i32, i32
  }
  func.func @transform_3(%arg0: i32, %arg1: i32) -> (i32, i32) {
    %c0_i32 = arith.constant 0 : i32
    %c0_i32_0 = arith.constant 0 : i32
    return %arg1, %c0_i32 : i32, i32
  }
  func.func @transform_4(%arg0: i32, %arg1: i32) -> (i32, i32) {
    %c0_i32 = arith.constant 0 : i32
    %c0_i32_0 = arith.constant 0 : i32
    %c0_i32_1 = arith.constant 0 : i32
    return %c0_i32, %c0_i32_0 : i32, i32
  }
  func.func @transform_5(%arg0: i32, %arg1: i32) -> (i32, i32) {
    %c0_i32 = arith.constant 0 : i32
    %c0_i32_0 = arith.constant 0 : i32
    return %arg0, %c0_i32 : i32, i32
  }
}

</mosaic_0001>

<llo_original>
// kernel: tpu_custom_call.1
$region0: #{tpu_custom_call.1}
  #allocation0 [shape = 'u32[]', space=smem, size = 0x4, offset = 0x4, fixed_abs, tag = 'smem constant byte address 0x4 - core index']
  #allocation1 [shape = 'u32[72,128]{1,0:T(1,128)}', space=vmem, size = 0x9000, scoped, tag = 'internal scratch']
  %s0 = inlined_call_operand.hbm [shape: bf16[16,256], index: 0, kind: input, shape index: {}]
  %s1 = inlined_call_operand.hbm [shape: bf16[256,256], index: 1, kind: input, shape index: {}]
  %s2 = inlined_call_operand.hbm [shape: f32[1,256], index: 2, kind: input, shape index: {}]
  %s3 = inlined_call_operand.hbm [shape: bf16[256,256], index: 3, kind: input, shape index: {}]
  %s4 = inlined_call_operand.vmem [shape: f32[1,256], index: 4, kind: input, shape index: {}]
  %s5 = inlined_call_operand.hbm [shape: f32[16,256], index: 5, kind: output, shape index: {}]
  %s6 = sld [smem:[#allocation0]]
  $region50: #{tpu_custom_call.1} parent=0
    _
  %s8 = ssub.s32 1, %s6
  %s9 = scalar_select 0, %s8, %s6
  $region1: #{tpu_custom_call.1} parent=0
    #allocation2 [shape = 'u8[8192]{0}', space=vmem, size = 0x2000, scoped, tag = 'input window, operand 0, single buffered']
    #allocation3 [shape = 's32[1]{0}', space=sflag, size = 0x4, scoped, tag = 'scoped memory for tpu_custom_call.1']
    #allocation4 [shape = 's32[1]{0}', space=sflag, size = 0x4, scoped, tag = 'scoped memory for tpu_custom_call.1']
    #allocation5 [shape = 'u8[131072]{0}', space=vmem, size = 0x20000, scoped, tag = 'input window, operand 1, single buffered']
    #allocation6 [shape = 's32[1]{0}', space=sflag, size = 0x4, scoped, tag = 'scoped memory for tpu_custom_call.1']
    #allocation7 [shape = 'u8[1024]{0}', space=vmem, size = 0x400, scoped, tag = 'input window, operand 2, single buffered']
    #allocation8 [shape = 'u8[131072]{0}', space=vmem, size = 0x20000, scoped, tag = 'input window, operand 3, single buffered']
    #allocation9 [shape = 's32[1]{0}', space=sflag, size = 0x4, scoped, tag = 'scoped memory for tpu_custom_call.1']
    #allocation10 [shape = 'u8[16384]{0}', space=vmem, size = 0x4000, scoped, tag = 'output window, operand 0, single buffered']
    %10 = vsyncpa [#allocation3], 0
    %11 = vsyncpa [#allocation6], 0
    %12 = vsyncpa [#allocation9], 0
    %13 = vsyncpa [#allocation4], 0
    // Predicated region
    $region2: #{tpu_custom_call.1} parent=1 // pred_check
      _
    $region3: #{tpu_custom_call.1} parent=1 // pred_check_branch
      %15 = sbr.rel (0) target = $region5
    $region4: #{tpu_custom_call.1} parent=1 // pred_region
      %17 = vsyncadd [#allocation3], 0
      %s18 = sshll.u32 %s0, 4
      %s19 = int_to_ptr.hbm [resolvable:$true] %s18
      %s20 = sshll.u32 [#allocation2], 4
      %s21 = int_to_ptr.vmem [resolvable:$true] %s20
      %26 = dma.hbm_to_vmem [thread:$0]  %s19, 256, %s21, [#allocation3], 128, 128, 8
    $region5: #{tpu_custom_call.1} parent=1 // pred_fallthru
      _
    // Predicated region
    $region6: #{tpu_custom_call.1} parent=1 // pred_check
      _
    $region7: #{tpu_custom_call.1} parent=1 // pred_check_branch
      %28 = sbr.rel (0) target = $region9
    $region8: #{tpu_custom_call.1} parent=1 // pred_region
      %30 = vsyncadd [#allocation6], 0
      %s31 = sshll.u32 %s1, 4
      %s32 = int_to_ptr.hbm [resolvable:$true] %s31
      %s33 = sshll.u32 [#allocation5], 4
      %s34 = int_to_ptr.vmem [resolvable:$true] %s33
      %39 = dma.hbm_to_vmem [thread:$0]  %s32, 4096, %s34, [#allocation6], 128, 128, 8
    $region9: #{tpu_custom_call.1} parent=1 // pred_fallthru
      _
    // Predicated region
    $region10: #{tpu_custom_call.1} parent=1 // pred_check
      _
    $region11: #{tpu_custom_call.1} parent=1 // pred_check_branch
      %41 = sbr.rel (0) target = $region13
    $region12: #{tpu_custom_call.1} parent=1 // pred_region
      %43 = vsyncadd [#allocation6], 0
      %s45 = sshll.u32 %s2, 4
      %s46 = int_to_ptr.hbm [resolvable:$true] %s45
      %s47 = sshll.u32 [#allocation7], 4
      %s48 = int_to_ptr.vmem [resolvable:$true] %s47
      %50 = dma.hbm_to_vmem [thread:$0]  %s46, 32, %s48, [#allocation6]
    $region13: #{tpu_custom_call.1} parent=1 // pred_fallthru
      _
    // Predicated region
    $region14: #{tpu_custom_call.1} parent=1 // pred_check
      _
    $region15: #{tpu_custom_call.1} parent=1 // pred_check_branch
      %52 = sbr.rel (0) target = $region17
    $region16: #{tpu_custom_call.1} parent=1 // pred_region
      %54 = vsyncadd [#allocation9], 0
      %s55 = sshll.u32 %s3, 4
      %s56 = int_to_ptr.hbm [resolvable:$true] %s55
      %s57 = sshll.u32 [#allocation8], 4
      %s58 = int_to_ptr.vmem [resolvable:$true] %s57
      %63 = dma.hbm_to_vmem [thread:$0]  %s56, 4096, %s58, [#allocation9], 128, 128, 8
    $region17: #{tpu_custom_call.1} parent=1 // pred_fallthru
      _
    // Predicated region
    $region18: #{tpu_custom_call.1} parent=1 // pred_check
      _
    $region19: #{tpu_custom_call.1} parent=1 // pred_check_branch
      %65 = sbr.rel (0) target = $region21
    $region20: #{tpu_custom_call.1} parent=1 // pred_region
      _
    $region21: #{tpu_custom_call.1} parent=1 // pred_fallthru
      _
    // Predicated region
    $region22: #{tpu_custom_call.1} parent=1 // pred_check
      _
    $region23: #{tpu_custom_call.1} parent=1 // pred_check_branch
      %67 = sbr.rel (0) target = $region25
    $region24: #{tpu_custom_call.1} parent=1 // pred_region
      %69 = dma.done [#allocation3], 256
    $region25: #{tpu_custom_call.1} parent=1 // pred_fallthru
      _
    // Predicated region
    $region26: #{tpu_custom_call.1} parent=1 // pred_check
      _
    $region27: #{tpu_custom_call.1} parent=1 // pred_check_branch
      %71 = sbr.rel (0) target = $region29
    $region28: #{tpu_custom_call.1} parent=1 // pred_region
      %73 = dma.done [#allocation6], 4096
    $region29: #{tpu_custom_call.1} parent=1 // pred_fallthru
      _
    // Predicated region
    $region30: #{tpu_custom_call.1} parent=1 // pred_check
      _
    $region31: #{tpu_custom_call.1} parent=1 // pred_check_branch
      %75 = sbr.rel (0) target = $region33
    $region32: #{tpu_custom_call.1} parent=1 // pred_region
      %77 = dma.done [#allocation6], 32
    $region33: #{tpu_custom_call.1} parent=1 // pred_fallthru
      _
    // Predicated region
    $region34: #{tpu_custom_call.1} parent=1 // pred_check
      _
    $region35: #{tpu_custom_call.1} parent=1 // pred_check_branch
      %79 = sbr.rel (0) target = $region37
    $region36: #{tpu_custom_call.1} parent=1 // pred_region
      %81 = dma.done [#allocation9], 4096
    $region37: #{tpu_custom_call.1} parent=1 // pred_fallthru
      _
    %p82 = scmp.eq.s32.totalorder 0, 0
    // Predicated region
    $region38: #{tpu_custom_call.1} parent=1 // pred_check
      %p83 = pneg %p82
    $region39: #{tpu_custom_call.1} parent=1 // pred_check_branch
      %85 = sbr.rel (%p83) target = $region41
    $region40: #{tpu_custom_call.1} parent=1 // pred_region
      %v86 = vld [vmem:[%s4] sm:$0x3]
      %v88 = vperm.slane %v86, 0
      %v89 = vperm.slane %v86, 1
      %92 = vst [vmem:[#allocation10] sm:$0xff] %v88
      %93 = vst [vmem:[#allocation10 + $0x8] sm:$0xff] %v89
      %94 = vst [vmem:[#allocation10 + $0x10] sm:$0xff] %v88
      %95 = vst [vmem:[#allocation10 + $0x18] sm:$0xff] %v89
    $region41: #{tpu_custom_call.1} parent=1 // pred_fallthru
      _
    %v96 = vld [vmem:[#allocation2] sm:$0xff]
    %v97 = vld [vmem:[#allocation2 + $0x8] sm:$0xff]
    %v98 = vld [vmem:[#allocation5] sm:$0xff]
    %v99 = vld [vmem:[#allocation5 + $0x8] sm:$0xff]
    %v100 = vld [vmem:[#allocation5 + $0x10] sm:$0xff]
    %v101 = vld [vmem:[#allocation5 + $0x18] sm:$0xff]
    %v102 = vld [vmem:[#allocation5 + $0x20] sm:$0xff]
    %v103 = vld [vmem:[#allocation5 + $0x28] sm:$0xff]
    %v104 = vld [vmem:[#allocation5 + $0x30] sm:$0xff]
    %v105 = vld [vmem:[#allocation5 + $0x38] sm:$0xff]
    %v106 = vld [vmem:[#allocation5 + $0x40] sm:$0xff]
    %v107 = vld [vmem:[#allocation5 + $0x48] sm:$0xff]
    %v108 = vld [vmem:[#allocation5 + $0x50] sm:$0xff]
    %v109 = vld [vmem:[#allocation5 + $0x58] sm:$0xff]
    %v110 = vld [vmem:[#allocation5 + $0x60] sm:$0xff]
    %v111 = vld [vmem:[#allocation5 + $0x68] sm:$0xff]
    %v112 = vld [vmem:[#allocation5 + $0x70] sm:$0xff]
    %v113 = vld [vmem:[#allocation5 + $0x78] sm:$0xff]
    %v114 = vld [vmem:[#allocation5 + $0x80] sm:$0xff]
    %v115 = vld [vmem:[#allocation5 + $0x88] sm:$0xff]
    %v116 = vld [vmem:[#allocation5 + $0x90] sm:$0xff]
    %v117 = vld [vmem:[#allocation5 + $0x98] sm:$0xff]
    %v118 = vld [vmem:[#allocation5 + $0xa0] sm:$0xff]
    %v119 = vld [vmem:[#allocation5 + $0xa8] sm:$0xff]
    %v120 = vld [vmem:[#allocation5 + $0xb0] sm:$0xff]
    %v121 = vld [vmem:[#allocation5 + $0xb8] sm:$0xff]
    %v122 = vld [vmem:[#allocation5 + $0xc0] sm:$0xff]
    %v123 = vld [vmem:[#allocation5 + $0xc8] sm:$0xff]
    %v124 = vld [vmem:[#allocation5 + $0xd0] sm:$0xff]
    %v125 = vld [vmem:[#allocation5 + $0xd8] sm:$0xff]
    %v126 = vld [vmem:[#allocation5 + $0xe0] sm:$0xff]
    %v127 = vld [vmem:[#allocation5 + $0xe8] sm:$0xff]
    %v128 = vld [vmem:[#allocation5 + $0xf0] sm:$0xff]
    %v129 = vld [vmem:[#allocation5 + $0xf8] sm:$0xff]
    %v130 = vld [vmem:[#allocation7] sm:$0x3]
    %v132 = vperm.slane %v130, 0
    %v133 = vperm.slane %v130, 1
    %v138 = vunpack.c.l.b16 %v96
    %v139 = vunpack.c.h.b16 %v96
    %v140 = vunpack.c.l.b16 %v97
    %v141 = vunpack.c.h.b16 %v97
    %v142 = vpack.c.b16 %v140, %v138
    %v143 = vpack.c.b16 %v141, %v139
    %v178 = vunpack.c.l.b16 %v98
    %v179 = vunpack.c.h.b16 %v98
    %v180 = vunpack.c.l.b16 %v99
    %v181 = vunpack.c.h.b16 %v99
    %v182 = vunpack.c.l.b16 %v100
    %v183 = vunpack.c.h.b16 %v100
    %v184 = vunpack.c.l.b16 %v101
    %v185 = vunpack.c.h.b16 %v101
    %v186 = vunpack.c.l.b16 %v102
    %v187 = vunpack.c.h.b16 %v102
    %v188 = vunpack.c.l.b16 %v103
    %v189 = vunpack.c.h.b16 %v103
    %v190 = vunpack.c.l.b16 %v104
    %v191 = vunpack.c.h.b16 %v104
    %v192 = vunpack.c.l.b16 %v105
    %v193 = vunpack.c.h.b16 %v105
    %v194 = vunpack.c.l.b16 %v106
    %v195 = vunpack.c.h.b16 %v106
    %v196 = vunpack.c.l.b16 %v107
    %v197 = vunpack.c.h.b16 %v107
    %v198 = vunpack.c.l.b16 %v108
    %v199 = vunpack.c.h.b16 %v108
    %v200 = vunpack.c.l.b16 %v109
    %v201 = vunpack.c.h.b16 %v109
    %v202 = vunpack.c.l.b16 %v110
    %v203 = vunpack.c.h.b16 %v110
    %v204 = vunpack.c.l.b16 %v111
    %v205 = vunpack.c.h.b16 %v111
    %v206 = vunpack.c.l.b16 %v112
    %v207 = vunpack.c.h.b16 %v112
    %v208 = vunpack.c.l.b16 %v113
    %v209 = vunpack.c.h.b16 %v113
    %v210 = vunpack.c.l.b16 %v114
    %v211 = vunpack.c.h.b16 %v114
    %v212 = vunpack.c.l.b16 %v115
    %v213 = vunpack.c.h.b16 %v115
    %v214 = vunpack.c.l.b16 %v116
    %v215 = vunpack.c.h.b16 %v116
    %v216 = vunpack.c.l.b16 %v117
    %v217 = vunpack.c.h.b16 %v117
    %v218 = vunpack.c.l.b16 %v118
    %v219 = vunpack.c.h.b16 %v118
    %v220 = vunpack.c.l.b16 %v119
    %v221 = vunpack.c.h.b16 %v119
    %v222 = vunpack.c.l.b16 %v120
    %v223 = vunpack.c.h.b16 %v120
    %v224 = vunpack.c.l.b16 %v121
    %v225 = vunpack.c.h.b16 %v121
    %v226 = vunpack.c.l.b16 %v122
    %v227 = vunpack.c.h.b16 %v122
    %v228 = vunpack.c.l.b16 %v123
    %v229 = vunpack.c.h.b16 %v123
    %v230 = vunpack.c.l.b16 %v124
    %v231 = vunpack.c.h.b16 %v124
    %v232 = vunpack.c.l.b16 %v125
    %v233 = vunpack.c.h.b16 %v125
    %v234 = vunpack.c.l.b16 %v126
    %v235 = vunpack.c.h.b16 %v126
    %v236 = vunpack.c.l.b16 %v127
    %v237 = vunpack.c.h.b16 %v127
    %v238 = vunpack.c.l.b16 %v128
    %v239 = vunpack.c.h.b16 %v128
    %v240 = vunpack.c.l.b16 %v129
    %v241 = vunpack.c.h.b16 %v129
    %v242 = vpack.c.b16 %v180, %v178
    %v243 = vpack.c.b16 %v181, %v179
    %v244 = vpack.c.b16 %v184, %v182
    %v245 = vpack.c.b16 %v185, %v183
    %v246 = vpack.c.b16 %v188, %v186
    %v247 = vpack.c.b16 %v189, %v187
    %v248 = vpack.c.b16 %v192, %v190
    %v249 = vpack.c.b16 %v193, %v191
    %v250 = vpack.c.b16 %v196, %v194
    %v251 = vpack.c.b16 %v197, %v195
    %v252 = vpack.c.b16 %v200, %v198
    %v253 = vpack.c.b16 %v201, %v199
    %v254 = vpack.c.b16 %v204, %v202
    %v255 = vpack.c.b16 %v205, %v203
    %v256 = vpack.c.b16 %v208, %v206
    %v257 = vpack.c.b16 %v209, %v207
    %v258 = vpack.c.b16 %v212, %v210
    %v259 = vpack.c.b16 %v213, %v211
    %v260 = vpack.c.b16 %v216, %v214
    %v261 = vpack.c.b16 %v217, %v215
    %v262 = vpack.c.b16 %v220, %v218
    %v263 = vpack.c.b16 %v221, %v219
    %v264 = vpack.c.b16 %v224, %v222
    %v265 = vpack.c.b16 %v225, %v223
    %v266 = vpack.c.b16 %v228, %v226
    %v267 = vpack.c.b16 %v229, %v227
    %v268 = vpack.c.b16 %v232, %v230
    %v269 = vpack.c.b16 %v233, %v231
    %v270 = vpack.c.b16 %v236, %v234
    %v271 = vpack.c.b16 %v237, %v235
    %v272 = vpack.c.b16 %v240, %v238
    %v273 = vpack.c.b16 %v241, %v239
    %306 = vmatpush.bf16.msra.mxu0 %v256
    %307 = vmatpush.bf16.msra.mxu0 %v254
    %308 = vmatpush.bf16.msra.mxu0 %v252
    %309 = vmatpush.bf16.msra.mxu0 %v250
    %310 = vmatpush.bf16.msra.mxu0 %v248
    %311 = vmatpush.bf16.msra.mxu0 %v246
    %312 = vmatpush.bf16.msra.mxu0 %v244
    %313 = vmatpush.bf16.msra.mxu0 %v242
    %314 = vmatmul.bf16.gmra.mxu0 %v142
    %v315 = vpop.f32.mrf.mxu0
    %v316 = vadd.f32 %v132, %v315
    %v317 = vpop.f32.mrf.mxu0
    %v318 = vadd.f32 %v132, %v317
    %319 = vdwg.mxu0
    %320 = vmatpush.bf16.msra.mxu0 %v272
    %321 = vmatpush.bf16.msra.mxu0 %v270
    %322 = vmatpush.bf16.msra.mxu0 %v268
    %323 = vmatpush.bf16.msra.mxu0 %v266
    %324 = vmatpush.bf16.msra.mxu0 %v264
    %325 = vmatpush.bf16.msra.mxu0 %v262
    %326 = vmatpush.bf16.msra.mxu0 %v260
    %327 = vmatpush.bf16.msra.mxu0 %v258
    %328 = vmatmul.bf16.gmra.mxu0 %v143
    %v329 = vpop.f32.mrf.mxu0
    %v330 = vadd.f32 %v316, %v329
    %v331 = vpop.f32.mrf.mxu0
    %v332 = vadd.f32 %v318, %v331
    %333 = vdwg.mxu0
    %334 = vmatpush.bf16.msra.mxu0 %v257
    %335 = vmatpush.bf16.msra.mxu0 %v255
    %336 = vmatpush.bf16.msra.mxu0 %v253
    %337 = vmatpush.bf16.msra.mxu0 %v251
    %338 = vmatpush.bf16.msra.mxu0 %v249
    %339 = vmatpush.bf16.msra.mxu0 %v247
    %340 = vmatpush.bf16.msra.mxu0 %v245
    %341 = vmatpush.bf16.msra.mxu0 %v243
    %342 = vmatmul.bf16.gmra.mxu0 %v142
    %v343 = vpop.f32.mrf.mxu0
    %v344 = vadd.f32 %v133, %v343
    %v345 = vpop.f32.mrf.mxu0
    %v346 = vadd.f32 %v133, %v345
    %347 = vdwg.mxu0
    %348 = vmatpush.bf16.msra.mxu0 %v273
    %349 = vmatpush.bf16.msra.mxu0 %v271
    %350 = vmatpush.bf16.msra.mxu0 %v269
    %351 = vmatpush.bf16.msra.mxu0 %v267
    %352 = vmatpush.bf16.msra.mxu0 %v265
    %353 = vmatpush.bf16.msra.mxu0 %v263
    %354 = vmatpush.bf16.msra.mxu0 %v261
    %355 = vmatpush.bf16.msra.mxu0 %v259
    %356 = vmatmul.bf16.gmra.mxu0 %v143
    %v357 = vpop.f32.mrf.mxu0
    %v358 = vadd.f32 %v344, %v357
    %v359 = vpop.f32.mrf.mxu0
    %v360 = vadd.f32 %v346, %v359
    %361 = vdwg.mxu0
    %v362 = vmax.f32 %v330, 0.0
    %v363 = vmax.f32 %v358, 0.0
    %v364 = vmax.f32 %v332, 0.0
    %v365 = vmax.f32 %v360, 0.0
    %v366 = vld [vmem:[#allocation10] sm:$0xff]
    %v367 = vld [vmem:[#allocation10 + $0x8] sm:$0xff]
    %v368 = vld [vmem:[#allocation10 + $0x10] sm:$0xff]
    %v369 = vld [vmem:[#allocation10 + $0x18] sm:$0xff]
    %v370 = vpack.c.bf16 %v364, %v362
    %v371 = vpack.c.bf16 %v365, %v363
    %v372 = vld [vmem:[#allocation8] sm:$0xff]
    %v373 = vld [vmem:[#allocation8 + $0x8] sm:$0xff]
    %v374 = vld [vmem:[#allocation8 + $0x10] sm:$0xff]
    %v375 = vld [vmem:[#allocation8 + $0x18] sm:$0xff]
    %v376 = vld [vmem:[#allocation8 + $0x20] sm:$0xff]
    %v377 = vld [vmem:[#allocation8 + $0x28] sm:$0xff]
    %v378 = vld [vmem:[#allocation8 + $0x30] sm:$0xff]
    %v379 = vld [vmem:[#allocation8 + $0x38] sm:$0xff]
    %v380 = vld [vmem:[#allocation8 + $0x40] sm:$0xff]
    %v381 = vld [vmem:[#allocation8 + $0x48] sm:$0xff]
    %v382 = vld [vmem:[#allocation8 + $0x50] sm:$0xff]
    %v383 = vld [vmem:[#allocation8 + $0x58] sm:$0xff]
    %v384 = vld [vmem:[#allocation8 + $0x60] sm:$0xff]
    %v385 = vld [vmem:[#allocation8 + $0x68] sm:$0xff]
    %v386 = vld [vmem:[#allocation8 + $0x70] sm:$0xff]
    %v387 = vld [vmem:[#allocation8 + $0x78] sm:$0xff]
    %v388 = vld [vmem:[#allocation8 + $0x80] sm:$0xff]
    %v389 = vld [vmem:[#allocation8 + $0x88] sm:$0xff]
    %v390 = vld [vmem:[#allocation8 + $0x90] sm:$0xff]
    %v391 = vld [vmem:[#allocation8 + $0x98] sm:$0xff]
    %v392 = vld [vmem:[#allocation8 + $0xa0] sm:$0xff]
    %v393 = vld [vmem:[#allocation8 + $0xa8] sm:$0xff]
    %v394 = vld [vmem:[#allocation8 + $0xb0] sm:$0xff]
    %v395 = vld [vmem:[#allocation8 + $0xb8] sm:$0xff]
    %v396 = vld [vmem:[#allocation8 + $0xc0] sm:$0xff]
    %v397 = vld [vmem:[#allocation8 + $0xc8] sm:$0xff]
    %v398 = vld [vmem:[#allocation8 + $0xd0] sm:$0xff]
    %v399 = vld [vmem:[#allocation8 + $0xd8] sm:$0xff]
    %v400 = vld [vmem:[#allocation8 + $0xe0] sm:$0xff]
    %v401 = vld [vmem:[#allocation8 + $0xe8] sm:$0xff]
    %v402 = vld [vmem:[#allocation8 + $0xf0] sm:$0xff]
    %v403 = vld [vmem:[#allocation8 + $0xf8] sm:$0xff]
    %v436 = vunpack.c.l.b16 %v372
    %v437 = vunpack.c.h.b16 %v372
    %v438 = vunpack.c.l.b16 %v373
    %v439 = vunpack.c.h.b16 %v373
    %v440 = vunpack.c.l.b16 %v374
    %v441 = vunpack.c.h.b16 %v374
    %v442 = vunpack.c.l.b16 %v375
    %v443 = vunpack.c.h.b16 %v375
    %v444 = vunpack.c.l.b16 %v376
    %v445 = vunpack.c.h.b16 %v376
    %v446 = vunpack.c.l.b16 %v377
    %v447 = vunpack.c.h.b16 %v377
    %v448 = vunpack.c.l.b16 %v378
    %v449 = vunpack.c.h.b16 %v378
    %v450 = vunpack.c.l.b16 %v379
    %v451 = vunpack.c.h.b16 %v379
    %v452 = vunpack.c.l.b16 %v380
    %v453 = vunpack.c.h.b16 %v380
    %v454 = vunpack.c.l.b16 %v381
    %v455 = vunpack.c.h.b16 %v381
    %v456 = vunpack.c.l.b16 %v382
    %v457 = vunpack.c.h.b16 %v382
    %v458 = vunpack.c.l.b16 %v383
    %v459 = vunpack.c.h.b16 %v383
    %v460 = vunpack.c.l.b16 %v384
    %v461 = vunpack.c.h.b16 %v384
    %v462 = vunpack.c.l.b16 %v385
    %v463 = vunpack.c.h.b16 %v385
    %v464 = vunpack.c.l.b16 %v386
    %v465 = vunpack.c.h.b16 %v386
    %v466 = vunpack.c.l.b16 %v387
    %v467 = vunpack.c.h.b16 %v387
    %v468 = vunpack.c.l.b16 %v388
    %v469 = vunpack.c.h.b16 %v388
    %v470 = vunpack.c.l.b16 %v389
    %v471 = vunpack.c.h.b16 %v389
    %v472 = vunpack.c.l.b16 %v390
    %v473 = vunpack.c.h.b16 %v390
    %v474 = vunpack.c.l.b16 %v391
    %v475 = vunpack.c.h.b16 %v391
    %v476 = vunpack.c.l.b16 %v392
    %v477 = vunpack.c.h.b16 %v392
    %v478 = vunpack.c.l.b16 %v393
    %v479 = vunpack.c.h.b16 %v393
    %v480 = vunpack.c.l.b16 %v394
    %v481 = vunpack.c.h.b16 %v394
    %v482 = vunpack.c.l.b16 %v395
    %v483 = vunpack.c.h.b16 %v395
    %v484 = vunpack.c.l.b16 %v396
    %v485 = vunpack.c.h.b16 %v396
    %v486 = vunpack.c.l.b16 %v397
    %v487 = vunpack.c.h.b16 %v397
    %v488 = vunpack.c.l.b16 %v398
    %v489 = vunpack.c.h.b16 %v398
    %v490 = vunpack.c.l.b16 %v399
    %v491 = vunpack.c.h.b16 %v399
    %v492 = vunpack.c.l.b16 %v400
    %v493 = vunpack.c.h.b16 %v400
    %v494 = vunpack.c.l.b16 %v401
    %v495 = vunpack.c.h.b16 %v401
    %v496 = vunpack.c.l.b16 %v402
    %v497 = vunpack.c.h.b16 %v402
    %v498 = vunpack.c.l.b16 %v403
    %v499 = vunpack.c.h.b16 %v403
    %v500 = vpack.c.b16 %v438, %v436
    %v501 = vpack.c.b16 %v439, %v437
    %v502 = vpack.c.b16 %v442, %v440
    %v503 = vpack.c.b16 %v443, %v441
    %v504 = vpack.c.b16 %v446, %v444
    %v505 = vpack.c.b16 %v447, %v445
    %v506 = vpack.c.b16 %v450, %v448
    %v507 = vpack.c.b16 %v451, %v449
    %v508 = vpack.c.b16 %v454, %v452
    %v509 = vpack.c.b16 %v455, %v453
    %v510 = vpack.c.b16 %v458, %v456
    %v511 = vpack.c.b16 %v459, %v457
    %v512 = vpack.c.b16 %v462, %v460
    %v513 = vpack.c.b16 %v463, %v461
    %v514 = vpack.c.b16 %v466, %v464
    %v515 = vpack.c.b16 %v467, %v465
    %v516 = vpack.c.b16 %v470, %v468
    %v517 = vpack.c.b16 %v471, %v469
    %v518 = vpack.c.b16 %v474, %v472
    %v519 = vpack.c.b16 %v475, %v473
    %v520 = vpack.c.b16 %v478, %v476
    %v521 = vpack.c.b16 %v479, %v477
    %v522 = vpack.c.b16 %v482, %v480
    %v523 = vpack.c.b16 %v483, %v481
    %v524 = vpack.c.b16 %v486, %v484
    %v525 = vpack.c.b16 %v487, %v485
    %v526 = vpack.c.b16 %v490, %v488
    %v527 = vpack.c.b16 %v491, %v489
    %v528 = vpack.c.b16 %v494, %v492
    %v529 = vpack.c.b16 %v495, %v493
    %v530 = vpack.c.b16 %v498, %v496
    %v531 = vpack.c.b16 %v499, %v497
    %564 = vmatpush.bf16.msra.mxu0 %v514
    %565 = vmatpush.bf16.msra.mxu0 %v512
    %566 = vmatpush.bf16.msra.mxu0 %v510
    %567 = vmatpush.bf16.msra.mxu0 %v508
    %568 = vmatpush.bf16.msra.mxu0 %v506
    %569 = vmatpush.bf16.msra.mxu0 %v504
    %570 = vmatpush.bf16.msra.mxu0 %v502
    %571 = vmatpush.bf16.msra.mxu0 %v500
    %572 = vmatmul.bf16.gmra.mxu0 %v370
    %v573 = vpop.f32.mrf.mxu0
    %v574 = vadd.f32 0.0, %v573
    %v575 = vpop.f32.mrf.mxu0
    %v576 = vadd.f32 0.0, %v575
    %577 = vdwg.mxu0
    %578 = vmatpush.bf16.msra.mxu0 %v530
    %579 = vmatpush.bf16.msra.mxu0 %v528
    %580 = vmatpush.bf16.msra.mxu0 %v526
    %581 = vmatpush.bf16.msra.mxu0 %v524
    %582 = vmatpush.bf16.msra.mxu0 %v522
    %583 = vmatpush.bf16.msra.mxu0 %v520
    %584 = vmatpush.bf16.msra.mxu0 %v518
    %585 = vmatpush.bf16.msra.mxu0 %v516
    %586 = vmatmul.bf16.gmra.mxu0 %v371
    %v587 = vpop.f32.mrf.mxu0
    %v588 = vadd.f32 %v574, %v587
    %v589 = vpop.f32.mrf.mxu0
    %v590 = vadd.f32 %v576, %v589
    %591 = vdwg.mxu0
    %592 = vmatpush.bf16.msra.mxu0 %v515
    %593 = vmatpush.bf16.msra.mxu0 %v513
    %594 = vmatpush.bf16.msra.mxu0 %v511
    %595 = vmatpush.bf16.msra.mxu0 %v509
    %596 = vmatpush.bf16.msra.mxu0 %v507
    %597 = vmatpush.bf16.msra.mxu0 %v505
    %598 = vmatpush.bf16.msra.mxu0 %v503
    %599 = vmatpush.bf16.msra.mxu0 %v501
    %600 = vmatmul.bf16.gmra.mxu0 %v370
    %v601 = vpop.f32.mrf.mxu0
    %v602 = vadd.f32 0.0, %v601
    %v603 = vpop.f32.mrf.mxu0
    %v604 = vadd.f32 0.0, %v603
    %605 = vdwg.mxu0
    %606 = vmatpush.bf16.msra.mxu0 %v531
    %607 = vmatpush.bf16.msra.mxu0 %v529
    %608 = vmatpush.bf16.msra.mxu0 %v527
    %609 = vmatpush.bf16.msra.mxu0 %v525
    %610 = vmatpush.bf16.msra.mxu0 %v523
    %611 = vmatpush.bf16.msra.mxu0 %v521
    %612 = vmatpush.bf16.msra.mxu0 %v519
    %613 = vmatpush.bf16.msra.mxu0 %v517
    %614 = vmatmul.bf16.gmra.mxu0 %v371
    %v615 = vpop.f32.mrf.mxu0
    %v616 = vadd.f32 %v602, %v615
    %v617 = vpop.f32.mrf.mxu0
    %v618 = vadd.f32 %v604, %v617
    %619 = vdwg.mxu0
    %v620 = vadd.f32 %v366, %v588
    %v621 = vadd.f32 %v367, %v616
    %v622 = vadd.f32 %v368, %v590
    %v623 = vadd.f32 %v369, %v618
    %624 = vst [vmem:[#allocation10] sm:$0xff] %v620
    %625 = vst [vmem:[#allocation10 + $0x8] sm:$0xff] %v621
    %626 = vst [vmem:[#allocation10 + $0x10] sm:$0xff] %v622
    %627 = vst [vmem:[#allocation10 + $0x18] sm:$0xff] %v623
    // Predicated region
    $region42: #{tpu_custom_call.1} parent=1 // pred_check
      _
    $region43: #{tpu_custom_call.1} parent=1 // pred_check_branch
      %629 = sbr.rel (0) target = $region45
    $region44: #{tpu_custom_call.1} parent=1 // pred_region
      %631 = vsyncadd [#allocation4], 0
      %s632 = sshll.u32 [#allocation10], 4
      %s633 = int_to_ptr.vmem [resolvable:$true] %s632
      %s634 = sshll.u32 %s5, 4
      %s635 = int_to_ptr.hbm [resolvable:$true] %s634
      %640 = dma.vmem_to_hbm [thread:$0]  %s633, 512, %s635, [#allocation4], 256, 256, 16
    $region45: #{tpu_custom_call.1} parent=1 // pred_fallthru
      _
    // Predicated region
    $region46: #{tpu_custom_call.1} parent=1 // pred_check
      _
    $region47: #{tpu_custom_call.1} parent=1 // pred_check_branch
      %642 = sbr.rel (0) target = $region49
    $region48: #{tpu_custom_call.1} parent=1 // pred_region
      %644 = dma.done [#allocation4], 512
    $region49: #{tpu_custom_call.1} parent=1 // pred_fallthru
      _
    %645 = vsyncpa [#allocation3], 1
    %646 = vsyncpa [#allocation6], 1
    %647 = vsyncpa [#allocation9], 1
    %648 = vsyncpa [#allocation4], 1

</llo_original>
